<compile_context>
chip_gen: v6e
topology: v6e:2x2x1
jax: 0.10.0
libtpu: 0.0.40
codegen_flags: <defaults>
</compile_context>

<pallas_src>
import jax
import jax.numpy as jnp
from jax.experimental import pallas as pl
from jax.experimental.pallas import tpu as pltpu


def mycell_kernel(x_ref, h_ref, wt_ref, b_ref, out_ref):
    # x_ref: (B, IN), h_ref: (B, OUT), wt_ref: (IN, OUT), b_ref: (1, OUT)
    x = x_ref[...]
    wt = wt_ref[...]
    # Start the accumulator with hidden-state + bias (pure VPU adds).
    y = h_ref[...] + b_ref[...]
    # Unrolled contraction over IN on the VPU:
    #   y[b, o] += x[b, k] * wt[k, o]
    # (B,1) x (1,OUT) broadcast multiply-adds; no MXU push/pop, no XLU.
    in_features = wt.shape[0]  # static (IN = 4)
    for k in range(in_features):
        y = y + x[:, k:k + 1] * wt[k:k + 1, :]
    out_ref[...] = jnp.tanh(y).astype(out_ref.dtype)


def mycell_forward(x, h, w, b):
    """new_h = tanh(x @ w.T + b + h); returns (new_h, new_h) like MyCell."""
    B, IN = x.shape
    OUT = w.shape[0]
    # One-time layout fixups OUTSIDE the kernel (not per-iteration work):
    w_t = jnp.transpose(w)    # (IN, OUT): kernel never transposes
    b2d = b.reshape(1, OUT)   # bias kept as a (1, OUT) VMEM operand

    vmem = pltpu.MemorySpace.VMEM
    new_h = pl.pallas_call(
        mycell_kernel,
        out_shape=jax.ShapeDtypeStruct((B, OUT), x.dtype),
        # No grid / index_maps: the whole problem fits in a sliver of one
        # vreg, so a single ungridded invocation avoids per-step pipelining
        # overhead and operand double-buffering.
        in_specs=[
            pl.BlockSpec(memory_space=vmem),  # x
            pl.BlockSpec(memory_space=vmem),  # h
            pl.BlockSpec(memory_space=vmem),  # w^T
            pl.BlockSpec(memory_space=vmem),  # b
        ],
        out_specs=pl.BlockSpec(memory_space=vmem),
    )(x, h, w_t, b2d)
    # PyTorch module returns (new_h, new_h)
    return new_h, new_h


if __name__ == "__main__":
    key = jax.random.PRNGKey(0)
    k_x, k_h, k_w, k_b = jax.random.split(key, 4)

    B, IN, OUT = 8, 4, 4  # small batch; Linear(4, 4)

    x = jax.random.normal(k_x, (B, IN), dtype=jnp.float32)
    h = jax.random.normal(k_h, (B, OUT), dtype=jnp.float32)

    # Deterministic PyTorch-style init: uniform(-1/sqrt(in), 1/sqrt(in))
    bound = 1.0 / (IN ** 0.5)
    w = jax.random.uniform(k_w, (OUT, IN), minval=-bound, maxval=bound,
                           dtype=jnp.float32)
    b = jax.random.uniform(k_b, (OUT,), minval=-bound, maxval=bound,
                           dtype=jnp.float32)

    new_h, new_h2 = mycell_forward(x, h, w, b)
    jax.block_until_ready(new_h)

    # Correctness check against pure-JAX reference
    ref = jnp.tanh(x @ w.T + b + h)
    assert jnp.allclose(new_h, ref, atol=1e-5, rtol=1e-5)
    assert jnp.array_equal(new_h, new_h2)

    print("KERNEL_OK")
</pallas_src>

<mosaic_0001>
module attributes {stable_mosaic.version = 11 : i64} {
  func.func @mycell_kernel(%arg0: memref<8x4xf32, #tpu.memory_space<vmem>>, %arg1: memref<8x4xf32, #tpu.memory_space<vmem>>, %arg2: memref<4x4xf32, #tpu.memory_space<vmem>>, %arg3: memref<1x4xf32, #tpu.memory_space<vmem>>, %arg4: memref<8x4xf32, #tpu.memory_space<vmem>>) attributes {dimension_semantics = [], scalar_prefetch = 0 : i64, scratch_operands = 0 : i64, tpu.core_type = #tpu.core_type<tc>} {
    %c0 = arith.constant 0 : index
    %c0_0 = arith.constant 0 : index
    %0 = vector.load %arg0[%c0, %c0_0] : memref<8x4xf32, #tpu.memory_space<vmem>>, vector<8x4xf32>
    %c0_1 = arith.constant 0 : index
    %c0_2 = arith.constant 0 : index
    %1 = vector.load %arg2[%c0_1, %c0_2] : memref<4x4xf32, #tpu.memory_space<vmem>>, vector<4x4xf32>
    %c0_3 = arith.constant 0 : index
    %c0_4 = arith.constant 0 : index
    %2 = vector.load %arg1[%c0_3, %c0_4] : memref<8x4xf32, #tpu.memory_space<vmem>>, vector<8x4xf32>
    %c0_5 = arith.constant 0 : index
    %c0_6 = arith.constant 0 : index
    %3 = vector.load %arg3[%c0_5, %c0_6] : memref<1x4xf32, #tpu.memory_space<vmem>>, vector<1x4xf32>
    %4 = vector.broadcast %3 : vector<1x4xf32> to vector<8x4xf32>
    %5 = arith.addf %2, %4 : vector<8x4xf32>
    %6 = vector.extract_strided_slice %0 {offsets = [0, 0], sizes = [8, 1], strides = [1, 1]} : vector<8x4xf32> to vector<8x1xf32>
    %7 = vector.extract_strided_slice %1 {offsets = [0, 0], sizes = [1, 4], strides = [1, 1]} : vector<4x4xf32> to vector<1x4xf32>
    %8 = vector.broadcast %6 : vector<8x1xf32> to vector<8x4xf32>
    %9 = vector.broadcast %7 : vector<1x4xf32> to vector<8x4xf32>
    %10 = arith.mulf %8, %9 : vector<8x4xf32>
    %11 = arith.addf %5, %10 : vector<8x4xf32>
    %12 = vector.extract_strided_slice %0 {offsets = [0, 1], sizes = [8, 1], strides = [1, 1]} : vector<8x4xf32> to vector<8x1xf32>
    %13 = vector.extract_strided_slice %1 {offsets = [1, 0], sizes = [1, 4], strides = [1, 1]} : vector<4x4xf32> to vector<1x4xf32>
    %14 = vector.broadcast %12 : vector<8x1xf32> to vector<8x4xf32>
    %15 = vector.broadcast %13 : vector<1x4xf32> to vector<8x4xf32>
    %16 = arith.mulf %14, %15 : vector<8x4xf32>
    %17 = arith.addf %11, %16 : vector<8x4xf32>
    %18 = vector.extract_strided_slice %0 {offsets = [0, 2], sizes = [8, 1], strides = [1, 1]} : vector<8x4xf32> to vector<8x1xf32>
    %19 = vector.extract_strided_slice %1 {offsets = [2, 0], sizes = [1, 4], strides = [1, 1]} : vector<4x4xf32> to vector<1x4xf32>
    %20 = vector.broadcast %18 : vector<8x1xf32> to vector<8x4xf32>
    %21 = vector.broadcast %19 : vector<1x4xf32> to vector<8x4xf32>
    %22 = arith.mulf %20, %21 : vector<8x4xf32>
    %23 = arith.addf %17, %22 : vector<8x4xf32>
    %24 = vector.extract_strided_slice %0 {offsets = [0, 3], sizes = [8, 1], strides = [1, 1]} : vector<8x4xf32> to vector<8x1xf32>
    %25 = vector.extract_strided_slice %1 {offsets = [3, 0], sizes = [1, 4], strides = [1, 1]} : vector<4x4xf32> to vector<1x4xf32>
    %26 = vector.broadcast %24 : vector<8x1xf32> to vector<8x4xf32>
    %27 = vector.broadcast %25 : vector<1x4xf32> to vector<8x4xf32>
    %28 = arith.mulf %26, %27 : vector<8x4xf32>
    %29 = arith.addf %23, %28 : vector<8x4xf32>
    %30 = math.tanh %29 : vector<8x4xf32>
    %c0_7 = arith.constant 0 : index
    %c0_8 = arith.constant 0 : index
    %31 = vector.load %arg4[%c0_7, %c0_8] : memref<8x4xf32, #tpu.memory_space<vmem>>, vector<8x4xf32>
    tpu.vector_store %arg4[%c0_7, %c0_8], %30 {strides = array<i32>} : memref<8x4xf32, #tpu.memory_space<vmem>>, vector<8x4xf32>,
    return
  }
}

</mosaic_0001>

<llo_original>
// kernel: tpu_custom_call.1
$region0: #{tpu_custom_call.1}
  #allocation0 [shape = 'u32[]', space=smem, size = 0x4, offset = 0x4, fixed_abs, tag = 'smem constant byte address 0x4 - core index']
  #allocation1 [shape = 'u32[144,128]{1,0:T(1,128)}', space=vmem, size = 0x12000, scoped, tag = 'internal scratch']
  %s0 = inlined_call_operand.vmem [shape: f32[8,4], index: 0, kind: input, shape index: {}]
  %s1 = inlined_call_operand.vmem [shape: f32[8,4], index: 1, kind: input, shape index: {}]
  %s2 = inlined_call_operand.vmem [shape: f32[4,4], index: 2, kind: input, shape index: {}]
  %s3 = inlined_call_operand.vmem [shape: f32[1,4], index: 3, kind: input, shape index: {}]
  %s4 = inlined_call_operand.vmem [shape: f32[8,4], index: 4, kind: output, shape index: {}]
  %s5 = sld [smem:[#allocation0]]
  $region26: #{tpu_custom_call.1} parent=0
    _
  %s7 = ssub.s32 1, %s5
  %s8 = scalar_select 0, %s7, %s5
  // Predicated region
  $region2: #{tpu_custom_call.1} parent=0 // pred_check
    _
  $region3: #{tpu_custom_call.1} parent=0 // pred_check_branch
    %10 = sbr.rel (0) target = $region5
  $region4: #{tpu_custom_call.1} parent=0 // pred_region
    _
  $region5: #{tpu_custom_call.1} parent=0 // pred_fallthru
    _
  // Predicated region
  $region6: #{tpu_custom_call.1} parent=0 // pred_check
    _
  $region7: #{tpu_custom_call.1} parent=0 // pred_check_branch
    %12 = sbr.rel (0) target = $region9
  $region8: #{tpu_custom_call.1} parent=0 // pred_region
    _
  $region9: #{tpu_custom_call.1} parent=0 // pred_fallthru
    _
  // Predicated region
  $region10: #{tpu_custom_call.1} parent=0 // pred_check
    _
  $region11: #{tpu_custom_call.1} parent=0 // pred_check_branch
    %14 = sbr.rel (0) target = $region13
  $region12: #{tpu_custom_call.1} parent=0 // pred_region
    _
  $region13: #{tpu_custom_call.1} parent=0 // pred_fallthru
    _
  // Predicated region
  $region14: #{tpu_custom_call.1} parent=0 // pred_check
    _
  $region15: #{tpu_custom_call.1} parent=0 // pred_check_branch
    %16 = sbr.rel (0) target = $region17
  $region16: #{tpu_custom_call.1} parent=0 // pred_region
    _
  $region17: #{tpu_custom_call.1} parent=0 // pred_fallthru
    _
  %v17 = vld [vmem:[%s0] sm:$0xff]
  %v18 = vld [vmem:[%s2] sm:$0xf]
  %v19 = vld [vmem:[%s1] sm:$0xff]
  %v20 = vld [vmem:[%s3] sm:$0x1]
  %v22 = vlaneseq
  %v23 = vshrl.u32 %v22, 7
  %v24 = vsub.s32 0, %v23
  %v25 = vrot.slane %v20, %v24
  %v27 = vadd.f32 %v19, %v25
  %29 = vset.pattern.permute.xlu0 0
  %30 = vperm.xlu0 %29, %v17
  %v31 = vpop.permute.xlu0 %30
  %v33 = vlaneseq
  %v34 = vshrl.u32 %v33, 7
  %v35 = vsub.s32 0, %v34
  %v36 = vrot.slane %v18, %v35
  %v37 = vmul.f32 %v31, %v36
  %v38 = vadd.f32 %v27, %v37
  %39 = vset.pattern.permute.xlu0 1
  %40 = vperm.xlu0 %39, %v17
  %v41 = vpop.permute.xlu0 %40
  %v43 = vlaneseq
  %v44 = vshrl.u32 %v43, 7
  %v45 = vsub.s32 1, %v44
  %v46 = vrot.slane %v18, %v45
  %v47 = vmul.f32 %v41, %v46
  %v48 = vadd.f32 %v38, %v47
  %49 = vset.pattern.permute.xlu0 2
  %50 = vperm.xlu0 %49, %v17
  %v51 = vpop.permute.xlu0 %50
  %v53 = vlaneseq
  %v54 = vshrl.u32 %v53, 7
  %v55 = vsub.s32 2, %v54
  %v56 = vrot.slane %v18, %v55
  %v57 = vmul.f32 %v51, %v56
  %v58 = vadd.f32 %v48, %v57
  %59 = vset.pattern.permute.xlu0 3
  %60 = vperm.xlu0 %59, %v17
  %v61 = vpop.permute.xlu0 %60
  %v63 = vlaneseq
  %v64 = vshrl.u32 %v63, 7
  %v65 = vsub.s32 3, %v64
  %v66 = vrot.slane %v18, %v65
  %v67 = vmul.f32 %v61, %v66
  %v68 = vadd.f32 %v58, %v67
  %v69 = vtanh.pop %v68
  %vm70 = vcmask 31744
  %71 = vst.msk [vmem:[%s4] sm:$0xff] %vm70, %v69
  // Predicated region
  $region18: #{tpu_custom_call.1} parent=0 // pred_check
    _
  $region19: #{tpu_custom_call.1} parent=0 // pred_check_branch
    %73 = sbr.rel (0) target = $region21
  $region20: #{tpu_custom_call.1} parent=0 // pred_region
    _
  $region21: #{tpu_custom_call.1} parent=0 // pred_fallthru
    _
  // Predicated region
  $region22: #{tpu_custom_call.1} parent=0 // pred_check
    _
  $region23: #{tpu_custom_call.1} parent=0 // pred_check_branch
    %75 = sbr.rel (0) target = $region25
  $region24: #{tpu_custom_call.1} parent=0 // pred_region
    _
  $region25: #{tpu_custom_call.1} parent=0 // pred_fallthru
    _

</llo_original>
